<compile_context>
chip_gen: v7x
topology: tpu7x:2x2x1
jax: 0.10.0
libtpu: 0.0.40
codegen_flags: <defaults>
</compile_context>

<pallas_src>
import functools

import jax
import jax.numpy as jnp
from jax.experimental import pallas as pl
from jax.experimental.pallas import tpu as pltpu

LANE = 128
HIDDEN = 512


def _round_up(n, m):
    return ((n + m - 1) // m) * m


def dqn_kernel(x_ref, w1_ref, b1_ref, w2_ref, b2_ref, w3_ref, b3_ref, o_ref):
    # Layer 1: bf16 MXU matmul, f32 accumulate; bias + ReLU in f32 on the VPU.
    h1 = jnp.dot(x_ref[...], w1_ref[...], preferred_element_type=jnp.float32)
    h1 = jnp.maximum(h1 + b1_ref[...], 0.0)
    # Layer 2: re-cast the activation to bf16 only for the MXU input.
    h2 = jnp.dot(h1.astype(w2_ref.dtype), w2_ref[...],
                 preferred_element_type=jnp.float32)
    h2 = jnp.maximum(h2 + b2_ref[...], 0.0)
    # Layer 3: output columns are padded to a full 128-lane slab (unmasked store).
    out = jnp.dot(h2.astype(w3_ref.dtype), w3_ref[...],
                  preferred_element_type=jnp.float32)
    o_ref[...] = (out + b3_ref[...]).astype(o_ref.dtype)


def prepare_dqn_params(w1, b1, w2, b2, w3, b3):
    """One-time preprocessing: bf16 weights for the MXU, f32 biases for the VPU,
    last layer padded to a 128-lane slab. Do this at parameter-setup time so the
    per-call forward pass never re-reads the f32 weights from HBM."""
    action_size = w3.shape[1]
    a_pad = _round_up(max(action_size, LANE), LANE)
    w1_bf = w1.astype(jnp.bfloat16)
    w2_bf = w2.astype(jnp.bfloat16)
    w3_p = jnp.pad(w3.astype(jnp.bfloat16), ((0, 0), (0, a_pad - action_size)))
    b1_f = b1.astype(jnp.float32).reshape(1, -1)
    b2_f = b2.astype(jnp.float32).reshape(1, -1)
    b3_p = jnp.pad(b3.astype(jnp.float32).reshape(1, -1),
                   ((0, 0), (0, a_pad - action_size)))
    prepped = (w1_bf, b1_f, w2_bf, b2_f, w3_p, b3_p)
    return jax.tree_util.tree_map(jax.block_until_ready, prepped), action_size


@functools.partial(jax.jit, static_argnames=("action_size",))
def dqn_forward(x, w1_bf, b1_f, w2_bf, b2_f, w3_p, b3_p, *, action_size):
    batch, state_size = x.shape
    hidden = w1_bf.shape[1]
    a_pad = w3_p.shape[1]

    # Only the (small) activation is cast per call; weights arrive pre-cast/padded.
    x_bf = x.astype(jnp.bfloat16)

    # Batch tile: multiple of 16 (bf16 sublane packing), capped at 1024 so the
    # ~0.35 us per-grid-step overhead is amortized; split into >= 2 tiles for
    # batch >= 32 so v7x's second TensorCore gets work via the "parallel" axis.
    if batch >= 32:
        tb = min(1024, _round_up(pl.cdiv(batch, 2), 16))
    else:
        tb = _round_up(max(batch, 1), 16)
    b_pad = _round_up(batch, tb)
    x_p = jnp.pad(x_bf, ((0, b_pad - batch), (0, 0)))
    grid = (b_pad // tb,)

    const = lambda i: (0, 0)  # weights/biases: DMA'd once, stay VMEM-resident
    in_specs = [
        pl.BlockSpec((tb, state_size), lambda i: (i, 0)),   # x: pipelined per tile
        pl.BlockSpec((state_size, hidden), const),          # w1
        pl.BlockSpec((1, hidden), const),                   # b1
        pl.BlockSpec((hidden, hidden), const),              # w2
        pl.BlockSpec((1, hidden), const),                   # b2
        pl.BlockSpec((hidden, a_pad), const),               # w3 (padded)
        pl.BlockSpec((1, a_pad), const),                    # b3 (padded)
    ]
    out_spec = pl.BlockSpec((tb, a_pad), lambda i: (i, 0))

    flops = 2 * b_pad * (state_size * hidden + hidden * hidden + hidden * a_pad)
    bytes_accessed = (
        x_p.size * 2 + w1_bf.size * 2 + w2_bf.size * 2 + w3_p.size * 2
        + b1_f.size * 4 + b2_f.size * 4 + b3_p.size * 4
        + b_pad * a_pad * 4
    )

    out = pl.pallas_call(
        dqn_kernel,
        out_shape=jax.ShapeDtypeStruct((b_pad, a_pad), jnp.float32),
        grid=grid,
        in_specs=in_specs,
        out_specs=out_spec,
        compiler_params=pltpu.CompilerParams(
            dimension_semantics=("parallel",),
            # Explicit scoped-VMEM limit: ~8 MiB needed at tb=1024; v5e's default
            # scoped limit is only 16 MiB, so give headroom (still < v7x physical).
            vmem_limit_bytes=32 * 1024 * 1024),
        cost_estimate=pl.CostEstimate(
            flops=flops, transcendentals=0, bytes_accessed=bytes_accessed),
    )(x_p, w1_bf, b1_f, w2_bf, b2_f, w3_p, b3_p)

    return out[:batch, :action_size]


def init_dqn_params(key, state_size, action_size, hidden=HIDDEN, dtype=jnp.float32):
    """Deterministic init mirroring PyTorch nn.Linear default (U(-1/sqrt(fan_in), +))."""
    def linear(k, fan_in, fan_out):
        kw, kb = jax.random.split(k)
        bound = 1.0 / jnp.sqrt(float(fan_in))
        w = jax.random.uniform(kw, (fan_in, fan_out), dtype, -bound, bound)
        b = jax.random.uniform(kb, (1, fan_out), dtype, -bound, bound)
        return w, b

    k1, k2, k3 = jax.random.split(key, 3)
    w1, b1 = linear(k1, state_size, hidden)
    w2, b2 = linear(k2, hidden, hidden)
    w3, b3 = linear(k3, hidden, action_size)
    return w1, b1, w2, b2, w3, b3


def dqn_reference(x, w1, b1, w2, b2, w3, b3):
    # Mimics kernel precision: bf16 MXU inputs, f32 accumulation / bias / ReLU.
    bf, f32 = jnp.bfloat16, jnp.float32
    up = lambda a: a.astype(bf).astype(f32)
    h1 = jnp.maximum(jnp.dot(up(x), up(w1)) + b1, 0.0)
    h2 = jnp.maximum(jnp.dot(up(h1), up(w2)) + b2, 0.0)
    return jnp.dot(up(h2), up(w3)) + b3


if __name__ == "__main__":
    batch = 2
    state_size = 16
    action_size = 8

    key = jax.random.PRNGKey(0)
    key_x, key_p = jax.random.split(key)

    x = jax.random.normal(key_x, (batch, state_size), dtype=jnp.float32)
    params = init_dqn_params(key_p, state_size, action_size)

    # One-time parameter prep (bf16 cast + lane padding), kept out of the hot path.
    prepped, a_size = prepare_dqn_params(*params)

    out = dqn_forward(x, *prepped, action_size=a_size)
    jax.block_until_ready(out)

    ref = dqn_reference(x, *params)
    assert out.shape == (batch, action_size)
    assert jnp.allclose(out, ref, atol=1e-2, rtol=1e-2), (
        float(jnp.max(jnp.abs(out - ref))))

    print("KERNEL_OK")
</pallas_src>

<mosaic_0001>
module attributes {stable_mosaic.version = 11 : i64} {
  func.func @dqn_kernel(%arg0: i32, %arg1: memref<16x16xbf16, #tpu.memory_space<vmem>>, %arg2: memref<16x512xbf16, #tpu.memory_space<vmem>>, %arg3: memref<1x512xf32, #tpu.memory_space<vmem>>, %arg4: memref<512x512xbf16, #tpu.memory_space<vmem>>, %arg5: memref<1x512xf32, #tpu.memory_space<vmem>>, %arg6: memref<512x128xbf16, #tpu.memory_space<vmem>>, %arg7: memref<1x128xf32, #tpu.memory_space<vmem>>, %arg8: memref<16x128xf32, #tpu.memory_space<vmem>>) attributes {dimension_semantics = [#tpu.dimension_semantics<parallel>], iteration_bounds = array<i64: 1>, scalar_prefetch = 0 : i64, scratch_operands = 0 : i64, tpu.core_type = #tpu.core_type<tc>, window_params = [{transform_indices = @transform_0, window_bounds = array<i64: 16, 16>}, {pipeline_mode = #tpu.pipeline_mode<synchronous>, transform_indices = @transform_1, window_bounds = array<i64: 16, 512>}, {pipeline_mode = #tpu.pipeline_mode<synchronous>, transform_indices = @transform_2, window_bounds = array<i64: 1, 512>}, {pipeline_mode = #tpu.pipeline_mode<synchronous>, transform_indices = @transform_3, window_bounds = array<i64: 512, 512>}, {pipeline_mode = #tpu.pipeline_mode<synchronous>, transform_indices = @transform_4, window_bounds = array<i64: 1, 512>}, {pipeline_mode = #tpu.pipeline_mode<synchronous>, transform_indices = @transform_5, window_bounds = array<i64: 512, 128>}, {pipeline_mode = #tpu.pipeline_mode<synchronous>, transform_indices = @transform_6, window_bounds = array<i64: 1, 128>}, {transform_indices = @transform_7, window_bounds = array<i64: 16, 128>}]} {
    %c0 = arith.constant 0 : index
    %c0_0 = arith.constant 0 : index
    %0 = vector.load %arg1[%c0, %c0_0] : memref<16x16xbf16, #tpu.memory_space<vmem>>, vector<16x16xbf16>
    %c0_1 = arith.constant 0 : index
    %c0_2 = arith.constant 0 : index
    %1 = vector.load %arg2[%c0_1, %c0_2] : memref<16x512xbf16, #tpu.memory_space<vmem>>, vector<16x512xbf16>
    %cst = arith.constant dense<0.000000e+00> : vector<16x512xf32>
    %2 = tpu.matmul %0, %1, %cst {dimension_numbers = #tpu.dot_dimension_numbers<[1], [0], [0], [1], [0, 0, 1, 1], [], []>} : vector<16x16xbf16>, vector<16x512xbf16>, vector<16x512xf32> -> vector<16x512xf32>
    %c0_3 = arith.constant 0 : index
    %c0_4 = arith.constant 0 : index
    %3 = vector.load %arg3[%c0_3, %c0_4] : memref<1x512xf32, #tpu.memory_space<vmem>>, vector<1x512xf32>
    %4 = vector.broadcast %3 : vector<1x512xf32> to vector<16x512xf32>
    %5 = arith.addf %2, %4 : vector<16x512xf32>
    %cst_5 = arith.constant 0.000000e+00 : f32
    %6 = vector.broadcast %cst_5 : f32 to vector<16x512xf32>
    %7 = arith.maximumf %5, %6 : vector<16x512xf32>
    %8 = arith.truncf %7 : vector<16x512xf32> to vector<16x512xbf16>
    %c0_6 = arith.constant 0 : index
    %c0_7 = arith.constant 0 : index
    %9 = vector.load %arg4[%c0_6, %c0_7] : memref<512x512xbf16, #tpu.memory_space<vmem>>, vector<512x512xbf16>
    %cst_8 = arith.constant dense<0.000000e+00> : vector<16x512xf32>
    %10 = tpu.matmul %8, %9, %cst_8 {dimension_numbers = #tpu.dot_dimension_numbers<[1], [0], [0], [1], [0, 0, 1, 1], [], []>} : vector<16x512xbf16>, vector<512x512xbf16>, vector<16x512xf32> -> vector<16x512xf32>
    %c0_9 = arith.constant 0 : index
    %c0_10 = arith.constant 0 : index
    %11 = vector.load %arg5[%c0_9, %c0_10] : memref<1x512xf32, #tpu.memory_space<vmem>>, vector<1x512xf32>
    %12 = vector.broadcast %11 : vector<1x512xf32> to vector<16x512xf32>
    %13 = arith.addf %10, %12 : vector<16x512xf32>
    %cst_11 = arith.constant 0.000000e+00 : f32
    %14 = vector.broadcast %cst_11 : f32 to vector<16x512xf32>
    %15 = arith.maximumf %13, %14 : vector<16x512xf32>
    %16 = arith.truncf %15 : vector<16x512xf32> to vector<16x512xbf16>
    %c0_12 = arith.constant 0 : index
    %c0_13 = arith.constant 0 : index
    %17 = vector.load %arg6[%c0_12, %c0_13] : memref<512x128xbf16, #tpu.memory_space<vmem>>, vector<512x128xbf16>
    %cst_14 = arith.constant dense<0.000000e+00> : vector<16x128xf32>
    %18 = tpu.matmul %16, %17, %cst_14 {dimension_numbers = #tpu.dot_dimension_numbers<[1], [0], [0], [1], [0, 0, 1, 1], [], []>} : vector<16x512xbf16>, vector<512x128xbf16>, vector<16x128xf32> -> vector<16x128xf32>
    %c0_15 = arith.constant 0 : index
    %c0_16 = arith.constant 0 : index
    %19 = vector.load %arg7[%c0_15, %c0_16] : memref<1x128xf32, #tpu.memory_space<vmem>>, vector<1x128xf32>
    %20 = vector.broadcast %19 : vector<1x128xf32> to vector<16x128xf32>
    %21 = arith.addf %18, %20 : vector<16x128xf32>
    %c0_17 = arith.constant 0 : index
    %c0_18 = arith.constant 0 : index
    %22 = vector.load %arg8[%c0_17, %c0_18] : memref<16x128xf32, #tpu.memory_space<vmem>>, vector<16x128xf32>
    tpu.vector_store %arg8[%c0_17, %c0_18], %21 {strides = array<i32>} : memref<16x128xf32, #tpu.memory_space<vmem>>, vector<16x128xf32>,
    return
  }
  func.func @transform_0(%arg0: i32) -> (i32, i32) {
    %c0_i32 = arith.constant 0 : i32
    %c0_i32_0 = arith.constant 0 : i32
    return %arg0, %c0_i32 : i32, i32
  }
  func.func @transform_1(%arg0: i32) -> (i32, i32) {
    %c0_i32 = arith.constant 0 : i32
    %c0_i32_0 = arith.constant 0 : i32
    %c0_i32_1 = arith.constant 0 : i32
    return %c0_i32, %c0_i32_0 : i32, i32
  }
  func.func @transform_2(%arg0: i32) -> (i32, i32) {
    %c0_i32 = arith.constant 0 : i32
    %c0_i32_0 = arith.constant 0 : i32
    %c0_i32_1 = arith.constant 0 : i32
    return %c0_i32, %c0_i32_0 : i32, i32
  }
  func.func @transform_3(%arg0: i32) -> (i32, i32) {
    %c0_i32 = arith.constant 0 : i32
    %c0_i32_0 = arith.constant 0 : i32
    %c0_i32_1 = arith.constant 0 : i32
    return %c0_i32, %c0_i32_0 : i32, i32
  }
  func.func @transform_4(%arg0: i32) -> (i32, i32) {
    %c0_i32 = arith.constant 0 : i32
    %c0_i32_0 = arith.constant 0 : i32
    %c0_i32_1 = arith.constant 0 : i32
    return %c0_i32, %c0_i32_0 : i32, i32
  }
  func.func @transform_5(%arg0: i32) -> (i32, i32) {
    %c0_i32 = arith.constant 0 : i32
    %c0_i32_0 = arith.constant 0 : i32
    %c0_i32_1 = arith.constant 0 : i32
    return %c0_i32, %c0_i32_0 : i32, i32
  }
  func.func @transform_6(%arg0: i32) -> (i32, i32) {
    %c0_i32 = arith.constant 0 : i32
    %c0_i32_0 = arith.constant 0 : i32
    %c0_i32_1 = arith.constant 0 : i32
    return %c0_i32, %c0_i32_0 : i32, i32
  }
  func.func @transform_7(%arg0: i32) -> (i32, i32) {
    %c0_i32 = arith.constant 0 : i32
    %c0_i32_0 = arith.constant 0 : i32
    return %arg0, %c0_i32 : i32, i32
  }
}

</mosaic_0001>

<llo_original>
// kernel: dqn_forward.1
$region0: #{dqn_forward.1}
  #allocation0 [shape = 'u32[]', space=smem, size = 0x4, offset = 0x4, fixed_abs, tag = 'smem constant byte address 0x4 - core index']
  #allocation1 [shape = 'u32[144,128]{1,0:T(1,128)}', space=vmem, size = 0x12000, scoped, tag = 'internal scratch']
  %s0 = inlined_call_operand.vmem [shape: bf16[16,16], index: 0, kind: input, shape index: {}]
  %s1 = inlined_call_operand.hbm [shape: bf16[16,512], index: 1, kind: input, shape index: {}]
  %s2 = inlined_call_operand.vmem [shape: f32[1,512], index: 2, kind: input, shape index: {}]
  %s3 = inlined_call_operand.hbm [shape: bf16[512,512], index: 3, kind: input, shape index: {}]
  %s4 = inlined_call_operand.vmem [shape: f32[1,512], index: 4, kind: input, shape index: {}]
  %s5 = inlined_call_operand.hbm [shape: bf16[512,128], index: 5, kind: input, shape index: {}]
  %s6 = inlined_call_operand.vmem [shape: f32[1,128], index: 6, kind: input, shape index: {}]
  %s7 = inlined_call_operand.vmem [shape: f32[16,128], index: 7, kind: output, shape index: {}]
  %s8 = sld [smem:[#allocation0]]
  $region50: #{dqn_forward.1} parent=0
    _
  %s10 = ssub.s32 1, %s8
  %s11 = scalar_select 0, %s10, %s8
  $region1: #{dqn_forward.1} parent=0
    #allocation2 [shape = 'u8[16384]{0}', space=vmem, size = 0x4000, scoped, tag = 'input window, operand 1, single buffered']
    #allocation3 [shape = 's32[1]{0}', space=sflag, size = 0x4, scoped, tag = 'scoped memory for dqn_forward.1']
    #allocation4 [shape = 'u8[524288]{0}', space=vmem, size = 0x80000, scoped, tag = 'input window, operand 3, single buffered']
    #allocation5 [shape = 's32[1]{0}', space=sflag, size = 0x4, scoped, tag = 'scoped memory for dqn_forward.1']
    #allocation6 [shape = 'u8[131072]{0}', space=vmem, size = 0x20000, scoped, tag = 'input window, operand 5, single buffered']
    %12 = vsyncpa [#allocation3], 0
    %13 = vsyncpa [#allocation5], 0
    // Predicated region
    $region2: #{dqn_forward.1} parent=1 // pred_check
      _
    $region3: #{dqn_forward.1} parent=1 // pred_check_branch
      %15 = sbr.rel (0) target = $region5
    $region4: #{dqn_forward.1} parent=1 // pred_region
      _
    $region5: #{dqn_forward.1} parent=1 // pred_fallthru
      _
    // Predicated region
    $region6: #{dqn_forward.1} parent=1 // pred_check
      _
    $region7: #{dqn_forward.1} parent=1 // pred_check_branch
      %17 = sbr.rel (0) target = $region9
    $region8: #{dqn_forward.1} parent=1 // pred_region
      %s19 = ssub.s32 512, 512
      %20 = vsyncadd [#allocation3], %s19
      %s21 = sshll.u32 [#allocation2], 4
      %s22 = int_to_ptr.vmem [resolvable:$true] %s21
      %27 = dma.hbm_to_vmem [thread:$0]  %s1, 512, %s22, [#allocation3], 256, 256, 16
    $region9: #{dqn_forward.1} parent=1 // pred_fallthru
      _
    // Predicated region
    $region10: #{dqn_forward.1} parent=1 // pred_check
      _
    $region11: #{dqn_forward.1} parent=1 // pred_check_branch
      %29 = sbr.rel (0) target = $region13
    $region12: #{dqn_forward.1} parent=1 // pred_region
      _
    $region13: #{dqn_forward.1} parent=1 // pred_fallthru
      _
    // Predicated region
    $region14: #{dqn_forward.1} parent=1 // pred_check
      _
    $region15: #{dqn_forward.1} parent=1 // pred_check_branch
      %31 = sbr.rel (0) target = $region17
    $region16: #{dqn_forward.1} parent=1 // pred_region
      %s33 = ssub.s32 16384, 16384
      %34 = vsyncadd [#allocation5], %s33
      %s35 = sshll.u32 [#allocation4], 4
      %s36 = int_to_ptr.vmem [resolvable:$true] %s35
      %41 = dma.hbm_to_vmem [thread:$0]  %s3, 16384, %s36, [#allocation5], 256, 256, 16
    $region17: #{dqn_forward.1} parent=1 // pred_fallthru
      _
    // Predicated region
    $region18: #{dqn_forward.1} parent=1 // pred_check
      _
    $region19: #{dqn_forward.1} parent=1 // pred_check_branch
      %43 = sbr.rel (0) target = $region21
    $region20: #{dqn_forward.1} parent=1 // pred_region
      _
    $region21: #{dqn_forward.1} parent=1 // pred_fallthru
      _
    // Predicated region
    $region22: #{dqn_forward.1} parent=1 // pred_check
      _
    $region23: #{dqn_forward.1} parent=1 // pred_check_branch
      %45 = sbr.rel (0) target = $region25
    $region24: #{dqn_forward.1} parent=1 // pred_region
      %s47 = ssub.s32 4096, 4096
      %48 = vsyncadd [#allocation5], %s47
      %s49 = sshll.u32 [#allocation6], 4
      %s50 = int_to_ptr.vmem [resolvable:$true] %s49
      %55 = dma.hbm_to_vmem [thread:$0]  %s5, 4096, %s50, [#allocation5], 64, 64, 4
    $region25: #{dqn_forward.1} parent=1 // pred_fallthru
      _
    // Predicated region
    $region26: #{dqn_forward.1} parent=1 // pred_check
      _
    $region27: #{dqn_forward.1} parent=1 // pred_check_branch
      %57 = sbr.rel (0) target = $region29
    $region28: #{dqn_forward.1} parent=1 // pred_region
      _
    $region29: #{dqn_forward.1} parent=1 // pred_fallthru
      _
    // Predicated region
    $region30: #{dqn_forward.1} parent=1 // pred_check
      _
    $region31: #{dqn_forward.1} parent=1 // pred_check_branch
      %59 = sbr.rel (0) target = $region33
    $region32: #{dqn_forward.1} parent=1 // pred_region
      %60 = dma.done [#allocation3], 512
    $region33: #{dqn_forward.1} parent=1 // pred_fallthru
      _
    // Predicated region
    $region34: #{dqn_forward.1} parent=1 // pred_check
      _
    $region35: #{dqn_forward.1} parent=1 // pred_check_branch
      %62 = sbr.rel (0) target = $region37
    $region36: #{dqn_forward.1} parent=1 // pred_region
      %63 = dma.done [#allocation5], 16384
    $region37: #{dqn_forward.1} parent=1 // pred_fallthru
      _
    // Predicated region
    $region38: #{dqn_forward.1} parent=1 // pred_check
      _
    $region39: #{dqn_forward.1} parent=1 // pred_check_branch
      %65 = sbr.rel (0) target = $region41
    $region40: #{dqn_forward.1} parent=1 // pred_region
      %66 = dma.done [#allocation5], 4096
    $region41: #{dqn_forward.1} parent=1 // pred_fallthru
      _
    %v68 = vld [vmem:[%s0] sm:$0xf]
    %v69 = vld [vmem:[%s0 + $0x4] sm:$0xf]
    %v70 = vld [vmem:[#allocation2] sm:$0xff]
    %v71 = vld [vmem:[#allocation2 + $0x8] sm:$0xff]
    %v72 = vld [vmem:[#allocation2 + $0x10] sm:$0xff]
    %v73 = vld [vmem:[#allocation2 + $0x18] sm:$0xff]
    %v74 = vld [vmem:[%s2] sm:$0xf]
    %v76 = vlaneseq
    %v77 = vshrl.u32 %v76, 7
    %v78 = vsub.s32 0, %v77
    %v79 = vrot.slane %v74, %v78
    %v80 = vlaneseq
    %v81 = vshrl.u32 %v80, 7
    %v82 = vsub.s32 1, %v81
    %v83 = vrot.slane %v74, %v82
    %v84 = vlaneseq
    %v85 = vshrl.u32 %v84, 7
    %v86 = vsub.s32 2, %v85
    %v87 = vrot.slane %v74, %v86
    %v88 = vlaneseq
    %v89 = vshrl.u32 %v88, 7
    %v90 = vsub.s32 3, %v89
    %v91 = vrot.slane %v74, %v90
    %v98 = vunpack.c.l.b16 %v68
    %v99 = vunpack.c.l.b16 %v69
    %v100 = vpack.c.b16 %v99, %v98
    %v105 = vunpack.c.l.b16 %v70
    %v106 = vunpack.c.h.b16 %v70
    %v107 = vunpack.c.l.b16 %v71
    %v108 = vunpack.c.h.b16 %v71
    %v109 = vunpack.c.l.b16 %v72
    %v110 = vunpack.c.h.b16 %v72
    %v111 = vunpack.c.l.b16 %v73
    %v112 = vunpack.c.h.b16 %v73
    %v113 = vpack.c.b16 %v109, %v105
    %v114 = vpack.c.b16 %v110, %v106
    %v115 = vpack.c.b16 %v111, %v107
    %v116 = vpack.c.b16 %v112, %v108
    %vm121 = vcmask 130048
    %v123 = vsel %vm121, %v100, 0
    %125 = vmatprep.subr.bf16.mxu0 %v114
    %126 = vmatpush1.bf16.msra.mxu0 %v113
    %127 = vmatprep.subr.bf16.mxu0 0
    %128 = vmatpush1.bf16.msra.mxu0 0
    %129 = vmatprep.subr.bf16.mxu0 0
    %130 = vmatpush1.bf16.msra.mxu0 0
    %131 = vmatprep.subr.bf16.mxu0 0
    %132 = vmatpush1.bf16.msra.mxu0 0
    %133 = vmatprep.subr.bf16.mxu0 0
    %134 = vmatpush1.bf16.msra.mxu0 0
    %135 = vmatprep.subr.bf16.mxu0 0
    %136 = vmatpush1.bf16.msra.mxu0 0
    %137 = vmatprep.subr.bf16.mxu0 0
    %138 = vmatpush1.bf16.msra.mxu0 0
    %139 = vmatprep.subr.bf16.mxu0 0
    %140 = vmatpush1.bf16.msra.mxu0 0
    %141 = vmatprep.subr.bf16.mxu0 0
    %142 = vmatpush1.bf16.msra.mxu0 0
    %143 = vmatprep.subr.bf16.mxu0 0
    %144 = vmatpush1.bf16.msra.mxu0 0
    %145 = vmatprep.subr.bf16.mxu0 0
    %146 = vmatpush1.bf16.msra.mxu0 0
    %147 = vmatprep.subr.bf16.mxu0 0
    %148 = vmatpush1.bf16.msra.mxu0 0
    %149 = vmatprep.subr.bf16.mxu0 0
    %150 = vmatpush1.bf16.msra.mxu0 0
    %151 = vmatprep.subr.bf16.mxu0 0
    %152 = vmatpush1.bf16.msra.mxu0 0
    %153 = vmatprep.subr.bf16.mxu0 0
    %154 = vmatpush1.bf16.msra.mxu0 0
    %155 = vmatprep.subr.bf16.mxu0 0
    %156 = vmatpush1.bf16.msra.mxu0 0
    %157 = vmatprep.mubr.bf16.mxu0 0
    %158 = vmatmul.mubr.bf16.gmra.mrb[0].mxu0 %v123
    %v159 = vpop.f32.mrb[0].mxu0
    %v160 = vadd.f32 %v79, %v159
    %v161 = vpop.f32.mrb[0].mxu0
    %v162 = vadd.f32 %v83, %v161
    %v163 = vpop.f32.mrb[0].mxu0
    %v164 = vadd.f32 %v79, %v163
    %v165 = vpop.f32.mrb[0].mxu0
    %v166 = vadd.f32 %v83, %v165
    %167 = vdwg.mxu0
    %168 = vmatprep.subr.bf16.mxu0 %v116
    %169 = vmatpush1.bf16.msra.mxu0 %v115
    %170 = vmatprep.subr.bf16.mxu0 0
    %171 = vmatpush1.bf16.msra.mxu0 0
    %172 = vmatprep.subr.bf16.mxu0 0
    %173 = vmatpush1.bf16.msra.mxu0 0
    %174 = vmatprep.subr.bf16.mxu0 0
    %175 = vmatpush1.bf16.msra.mxu0 0
    %176 = vmatprep.subr.bf16.mxu0 0
    %177 = vmatpush1.bf16.msra.mxu0 0
    %178 = vmatprep.subr.bf16.mxu0 0
    %179 = vmatpush1.bf16.msra.mxu0 0
    %180 = vmatprep.subr.bf16.mxu0 0
    %181 = vmatpush1.bf16.msra.mxu0 0
    %182 = vmatprep.subr.bf16.mxu0 0
    %183 = vmatpush1.bf16.msra.mxu0 0
    %184 = vmatprep.subr.bf16.mxu0 0
    %185 = vmatpush1.bf16.msra.mxu0 0
    %186 = vmatprep.subr.bf16.mxu0 0
    %187 = vmatpush1.bf16.msra.mxu0 0
    %188 = vmatprep.subr.bf16.mxu0 0
    %189 = vmatpush1.bf16.msra.mxu0 0
    %190 = vmatprep.subr.bf16.mxu0 0
    %191 = vmatpush1.bf16.msra.mxu0 0
    %192 = vmatprep.subr.bf16.mxu0 0
    %193 = vmatpush1.bf16.msra.mxu0 0
    %194 = vmatprep.subr.bf16.mxu0 0
    %195 = vmatpush1.bf16.msra.mxu0 0
    %196 = vmatprep.subr.bf16.mxu0 0
    %197 = vmatpush1.bf16.msra.mxu0 0
    %198 = vmatprep.subr.bf16.mxu0 0
    %199 = vmatpush1.bf16.msra.mxu0 0
    %200 = vmatprep.mubr.bf16.mxu0 0
    %201 = vmatmul.mubr.bf16.gmra.mrb[0].mxu0 %v123
    %v202 = vpop.f32.mrb[0].mxu0
    %v203 = vadd.f32 %v87, %v202
    %v204 = vpop.f32.mrb[0].mxu0
    %v205 = vadd.f32 %v91, %v204
    %v206 = vpop.f32.mrb[0].mxu0
    %v207 = vadd.f32 %v87, %v206
    %v208 = vpop.f32.mrb[0].mxu0
    %v209 = vadd.f32 %v91, %v208
    %210 = vdwg.mxu0
    %v211 = vmax.f32 %v160, 0.0
    %v212 = vmax.f32 %v162, 0.0
    %v213 = vmax.f32 %v203, 0.0
    %v214 = vmax.f32 %v205, 0.0
    %v215 = vmax.f32 %v164, 0.0
    %v216 = vmax.f32 %v166, 0.0
    %v217 = vmax.f32 %v207, 0.0
    %v218 = vmax.f32 %v209, 0.0
    %v219 = vpack.c.bf16 %v215, %v211
    %v220 = vpack.c.bf16 %v216, %v212
    %v221 = vpack.c.bf16 %v217, %v213
    %v222 = vpack.c.bf16 %v218, %v214
    %v223 = vld [vmem:[#allocation4] sm:$0xff]
    %v224 = vld [vmem:[#allocation4 + $0x8] sm:$0xff]
    %v225 = vld [vmem:[#allocation4 + $0x10] sm:$0xff]
    %v226 = vld [vmem:[#allocation4 + $0x18] sm:$0xff]
    %v227 = vld [vmem:[#allocation4 + $0x20] sm:$0xff]
    %v228 = vld [vmem:[#allocation4 + $0x28] sm:$0xff]
    %v229 = vld [vmem:[#allocation4 + $0x30] sm:$0xff]
    %v230 = vld [vmem:[#allocation4 + $0x38] sm:$0xff]
    %v231 = vld [vmem:[#allocation4 + $0x40] sm:$0xff]
    %v232 = vld [vmem:[#allocation4 + $0x48] sm:$0xff]
    %v233 = vld [vmem:[#allocation4 + $0x50] sm:$0xff]
    %v234 = vld [vmem:[#allocation4 + $0x58] sm:$0xff]
    %v235 = vld [vmem:[#allocation4 + $0x60] sm:$0xff]
    %v236 = vld [vmem:[#allocation4 + $0x68] sm:$0xff]
    %v237 = vld [vmem:[#allocation4 + $0x70] sm:$0xff]
    %v238 = vld [vmem:[#allocation4 + $0x78] sm:$0xff]
    %v239 = vld [vmem:[#allocation4 + $0x80] sm:$0xff]
    %v240 = vld [vmem:[#allocation4 + $0x88] sm:$0xff]
    %v241 = vld [vmem:[#allocation4 + $0x90] sm:$0xff]
    %v242 = vld [vmem:[#allocation4 + $0x98] sm:$0xff]
    %v243 = vld [vmem:[#allocation4 + $0xa0] sm:$0xff]
    %v244 = vld [vmem:[#allocation4 + $0xa8] sm:$0xff]
    %v245 = vld [vmem:[#allocation4 + $0xb0] sm:$0xff]
    %v246 = vld [vmem:[#allocation4 + $0xb8] sm:$0xff]
    %v247 = vld [vmem:[#allocation4 + $0xc0] sm:$0xff]
    %v248 = vld [vmem:[#allocation4 + $0xc8] sm:$0xff]
    %v249 = vld [vmem:[#allocation4 + $0xd0] sm:$0xff]
    %v250 = vld [vmem:[#allocation4 + $0xd8] sm:$0xff]
    %v251 = vld [vmem:[#allocation4 + $0xe0] sm:$0xff]
    %v252 = vld [vmem:[#allocation4 + $0xe8] sm:$0xff]
    %v253 = vld [vmem:[#allocation4 + $0xf0] sm:$0xff]
    %v254 = vld [vmem:[#allocation4 + $0xf8] sm:$0xff]
    %v255 = vld [vmem:[#allocation4 + $0x100] sm:$0xff]
    %v256 = vld [vmem:[#allocation4 + $0x108] sm:$0xff]
    %v257 = vld [vmem:[#allocation4 + $0x110] sm:$0xff]
    %v258 = vld [vmem:[#allocation4 + $0x118] sm:$0xff]
    %v259 = vld [vmem:[#allocation4 + $0x120] sm:$0xff]
    %v260 = vld [vmem:[#allocation4 + $0x128] sm:$0xff]
    %v261 = vld [vmem:[#allocation4 + $0x130] sm:$0xff]
    %v262 = vld [vmem:[#allocation4 + $0x138] sm:$0xff]
    %v263 = vld [vmem:[#allocation4 + $0x140] sm:$0xff]
    %v264 = vld [vmem:[#allocation4 + $0x148] sm:$0xff]
    %v265 = vld [vmem:[#allocation4 + $0x150] sm:$0xff]
    %v266 = vld [vmem:[#allocation4 + $0x158] sm:$0xff]
    %v267 = vld [vmem:[#allocation4 + $0x160] sm:$0xff]
    %v268 = vld [vmem:[#allocation4 + $0x168] sm:$0xff]
    %v269 = vld [vmem:[#allocation4 + $0x170] sm:$0xff]
    %v270 = vld [vmem:[#allocation4 + $0x178] sm:$0xff]
    %v271 = vld [vmem:[#allocation4 + $0x180] sm:$0xff]
    %v272 = vld [vmem:[#allocation4 + $0x188] sm:$0xff]
    %v273 = vld [vmem:[#allocation4 + $0x190] sm:$0xff]
    %v274 = vld [vmem:[#allocation4 + $0x198] sm:$0xff]
    %v275 = vld [vmem:[#allocation4 + $0x1a0] sm:$0xff]
    %v276 = vld [vmem:[#allocation4 + $0x1a8] sm:$0xff]
    %v277 = vld [vmem:[#allocation4 + $0x1b0] sm:$0xff]
    %v278 = vld [vmem:[#allocation4 + $0x1b8] sm:$0xff]
    %v279 = vld [vmem:[#allocation4 + $0x1c0] sm:$0xff]
    %v280 = vld [vmem:[#allocation4 + $0x1c8] sm:$0xff]
    %v281 = vld [vmem:[#allocation4 + $0x1d0] sm:$0xff]
    %v282 = vld [vmem:[#allocation4 + $0x1d8] sm:$0xff]
    %v283 = vld [vmem:[#allocation4 + $0x1e0] sm:$0xff]
    %v284 = vld [vmem:[#allocation4 + $0x1e8] sm:$0xff]
    %v285 = vld [vmem:[#allocation4 + $0x1f0] sm:$0xff]
    %v286 = vld [vmem:[#allocation4 + $0x1f8] sm:$0xff]
    %v287 = vld [vmem:[#allocation4 + $0x200] sm:$0xff]
    %v288 = vld [vmem:[#allocation4 + $0x208] sm:$0xff]
    %v289 = vld [vmem:[#allocation4 + $0x210] sm:$0xff]
    %v290 = vld [vmem:[#allocation4 + $0x218] sm:$0xff]
    %v291 = vld [vmem:[#allocation4 + $0x220] sm:$0xff]
    %v292 = vld [vmem:[#allocation4 + $0x228] sm:$0xff]
    %v293 = vld [vmem:[#allocation4 + $0x230] sm:$0xff]
    %v294 = vld [vmem:[#allocation4 + $0x238] sm:$0xff]
    %v295 = vld [vmem:[#allocation4 + $0x240] sm:$0xff]
    %v296 = vld [vmem:[#allocation4 + $0x248] sm:$0xff]
    %v297 = vld [vmem:[#allocation4 + $0x250] sm:$0xff]
    %v298 = vld [vmem:[#allocation4 + $0x258] sm:$0xff]
    %v299 = vld [vmem:[#allocation4 + $0x260] sm:$0xff]
    %v300 = vld [vmem:[#allocation4 + $0x268] sm:$0xff]
    %v301 = vld [vmem:[#allocation4 + $0x270] sm:$0xff]
    %v302 = vld [vmem:[#allocation4 + $0x278] sm:$0xff]
    %v303 = vld [vmem:[#allocation4 + $0x280] sm:$0xff]
    %v304 = vld [vmem:[#allocation4 + $0x288] sm:$0xff]
    %v305 = vld [vmem:[#allocation4 + $0x290] sm:$0xff]
    %v306 = vld [vmem:[#allocation4 + $0x298] sm:$0xff]
    %v307 = vld [vmem:[#allocation4 + $0x2a0] sm:$0xff]
    %v308 = vld [vmem:[#allocation4 + $0x2a8] sm:$0xff]
    %v309 = vld [vmem:[#allocation4 + $0x2b0] sm:$0xff]
    %v310 = vld [vmem:[#allocation4 + $0x2b8] sm:$0xff]
    %v311 = vld [vmem:[#allocation4 + $0x2c0] sm:$0xff]
    %v312 = vld [vmem:[#allocation4 + $0x2c8] sm:$0xff]
    %v313 = vld [vmem:[#allocation4 + $0x2d0] sm:$0xff]
    %v314 = vld [vmem:[#allocation4 + $0x2d8] sm:$0xff]
    %v315 = vld [vmem:[#allocation4 + $0x2e0] sm:$0xff]
    %v316 = vld [vmem:[#allocation4 + $0x2e8] sm:$0xff]
    %v317 = vld [vmem:[#allocation4 + $0x2f0] sm:$0xff]
    %v318 = vld [vmem:[#allocation4 + $0x2f8] sm:$0xff]
    %v319 = vld [vmem:[#allocation4 + $0x300] sm:$0xff]
    %v320 = vld [vmem:[#allocation4 + $0x308] sm:$0xff]
    %v321 = vld [vmem:[#allocation4 + $0x310] sm:$0xff]
    %v322 = vld [vmem:[#allocation4 + $0x318] sm:$0xff]
    %v323 = vld [vmem:[#allocation4 + $0x320] sm:$0xff]
    %v324 = vld [vmem:[#allocation4 + $0x328] sm:$0xff]
    %v325 = vld [vmem:[#allocation4 + $0x330] sm:$0xff]
    %v326 = vld [vmem:[#allocation4 + $0x338] sm:$0xff]
    %v327 = vld [vmem:[#allocation4 + $0x340] sm:$0xff]
    %v328 = vld [vmem:[#allocation4 + $0x348] sm:$0xff]
    %v329 = vld [vmem:[#allocation4 + $0x350] sm:$0xff]
    %v330 = vld [vmem:[#allocation4 + $0x358] sm:$0xff]
    %v331 = vld [vmem:[#allocation4 + $0x360] sm:$0xff]
    %v332 = vld [vmem:[#allocation4 + $0x368] sm:$0xff]
    %v333 = vld [vmem:[#allocation4 + $0x370] sm:$0xff]
    %v334 = vld [vmem:[#allocation4 + $0x378] sm:$0xff]
    %v335 = vld [vmem:[#allocation4 + $0x380] sm:$0xff]
    %v336 = vld [vmem:[#allocation4 + $0x388] sm:$0xff]
    %v337 = vld [vmem:[#allocation4 + $0x390] sm:$0xff]
    %v338 = vld [vmem:[#allocation4 + $0x398] sm:$0xff]
    %v339 = vld [vmem:[#allocation4 + $0x3a0] sm:$0xff]
    %v340 = vld [vmem:[#allocation4 + $0x3a8] sm:$0xff]
    %v341 = vld [vmem:[#allocation4 + $0x3b0] sm:$0xff]
    %v342 = vld [vmem:[#allocation4 + $0x3b8] sm:$0xff]
    %v343 = vld [vmem:[#allocation4 + $0x3c0] sm:$0xff]
    %v344 = vld [vmem:[#allocation4 + $0x3c8] sm:$0xff]
    %v345 = vld [vmem:[#allocation4 + $0x3d0] sm:$0xff]
    %v346 = vld [vmem:[#allocation4 + $0x3d8] sm:$0xff]
    %v347 = vld [vmem:[#allocation4 + $0x3e0] sm:$0xff]
    %v348 = vld [vmem:[#allocation4 + $0x3e8] sm:$0xff]
    %v349 = vld [vmem:[#allocation4 + $0x3f0] sm:$0xff]
    %v350 = vld [vmem:[#allocation4 + $0x3f8] sm:$0xff]
    %v351 = vld [vmem:[%s4] sm:$0xf]
    %v353 = vlaneseq
    %v354 = vshrl.u32 %v353, 7
    %v355 = vsub.s32 0, %v354
    %v356 = vrot.slane %v351, %v355
    %v357 = vlaneseq
    %v358 = vshrl.u32 %v357, 7
    %v359 = vsub.s32 1, %v358
    %v360 = vrot.slane %v351, %v359
    %v361 = vlaneseq
    %v362 = vshrl.u32 %v361, 7
    %v363 = vsub.s32 2, %v362
    %v364 = vrot.slane %v351, %v363
    %v365 = vlaneseq
    %v366 = vshrl.u32 %v365, 7
    %v367 = vsub.s32 3, %v366
    %v368 = vrot.slane %v351, %v367
    %v501 = vunpack.c.l.b16 %v223
    %v502 = vunpack.c.h.b16 %v223
    %v503 = vunpack.c.l.b16 %v224
    %v504 = vunpack.c.h.b16 %v224
    %v505 = vunpack.c.l.b16 %v225
    %v506 = vunpack.c.h.b16 %v225
    %v507 = vunpack.c.l.b16 %v226
    %v508 = vunpack.c.h.b16 %v226
    %v509 = vunpack.c.l.b16 %v227
    %v510 = vunpack.c.h.b16 %v227
    %v511 = vunpack.c.l.b16 %v228
    %v512 = vunpack.c.h.b16 %v228
    %v513 = vunpack.c.l.b16 %v229
    %v514 = vunpack.c.h.b16 %v229
    %v515 = vunpack.c.l.b16 %v230
    %v516 = vunpack.c.h.b16 %v230
    %v517 = vunpack.c.l.b16 %v231
    %v518 = vunpack.c.h.b16 %v231
    %v519 = vunpack.c.l.b16 %v232
    %v520 = vunpack.c.h.b16 %v232
    %v521 = vunpack.c.l.b16 %v233
    %v522 = vunpack.c.h.b16 %v233
    %v523 = vunpack.c.l.b16 %v234
    %v524 = vunpack.c.h.b16 %v234
    %v525 = vunpack.c.l.b16 %v235
    %v526 = vunpack.c.h.b16 %v235
    %v527 = vunpack.c.l.b16 %v236
    %v528 = vunpack.c.h.b16 %v236
    %v529 = vunpack.c.l.b16 %v237
    %v530 = vunpack.c.h.b16 %v237
    %v531 = vunpack.c.l.b16 %v238
    %v532 = vunpack.c.h.b16 %v238
    %v533 = vunpack.c.l.b16 %v239
    %v534 = vunpack.c.h.b16 %v239
    %v535 = vunpack.c.l.b16 %v240
    %v536 = vunpack.c.h.b16 %v240
    %v537 = vunpack.c.l.b16 %v241
    %v538 = vunpack.c.h.b16 %v241
    %v539 = vunpack.c.l.b16 %v242
    %v540 = vunpack.c.h.b16 %v242
    %v541 = vunpack.c.l.b16 %v243
    %v542 = vunpack.c.h.b16 %v243
    %v543 = vunpack.c.l.b16 %v244
    %v544 = vunpack.c.h.b16 %v244
    %v545 = vunpack.c.l.b16 %v245
    %v546 = vunpack.c.h.b16 %v245
    %v547 = vunpack.c.l.b16 %v246
    %v548 = vunpack.c.h.b16 %v246
    %v549 = vunpack.c.l.b16 %v247
    %v550 = vunpack.c.h.b16 %v247
    %v551 = vunpack.c.l.b16 %v248
    %v552 = vunpack.c.h.b16 %v248
    %v553 = vunpack.c.l.b16 %v249
    %v554 = vunpack.c.h.b16 %v249
    %v555 = vunpack.c.l.b16 %v250
    %v556 = vunpack.c.h.b16 %v250
    %v557 = vunpack.c.l.b16 %v251
    %v558 = vunpack.c.h.b16 %v251
    %v559 = vunpack.c.l.b16 %v252
    %v560 = vunpack.c.h.b16 %v252
    %v561 = vunpack.c.l.b16 %v253
    %v562 = vunpack.c.h.b16 %v253
    %v563 = vunpack.c.l.b16 %v254
    %v564 = vunpack.c.h.b16 %v254
    %v565 = vunpack.c.l.b16 %v255
    %v566 = vunpack.c.h.b16 %v255
    %v567 = vunpack.c.l.b16 %v256
    %v568 = vunpack.c.h.b16 %v256
    %v569 = vunpack.c.l.b16 %v257
    %v570 = vunpack.c.h.b16 %v257
    %v571 = vunpack.c.l.b16 %v258
    %v572 = vunpack.c.h.b16 %v258
    %v573 = vunpack.c.l.b16 %v259
    %v574 = vunpack.c.h.b16 %v259
    %v575 = vunpack.c.l.b16 %v260
    %v576 = vunpack.c.h.b16 %v260
    %v577 = vunpack.c.l.b16 %v261
    %v578 = vunpack.c.h.b16 %v261
    %v579 = vunpack.c.l.b16 %v262
    %v580 = vunpack.c.h.b16 %v262
    %v581 = vunpack.c.l.b16 %v263
    %v582 = vunpack.c.h.b16 %v263
    %v583 = vunpack.c.l.b16 %v264
    %v584 = vunpack.c.h.b16 %v264
    %v585 = vunpack.c.l.b16 %v265
    %v586 = vunpack.c.h.b16 %v265
    %v587 = vunpack.c.l.b16 %v266
    %v588 = vunpack.c.h.b16 %v266
    %v589 = vunpack.c.l.b16 %v267
    %v590 = vunpack.c.h.b16 %v267
    %v591 = vunpack.c.l.b16 %v268
    %v592 = vunpack.c.h.b16 %v268
    %v593 = vunpack.c.l.b16 %v269
    %v594 = vunpack.c.h.b16 %v269
    %v595 = vunpack.c.l.b16 %v270
    %v596 = vunpack.c.h.b16 %v270
    %v597 = vunpack.c.l.b16 %v271
    %v598 = vunpack.c.h.b16 %v271
    %v599 = vunpack.c.l.b16 %v272
    %v600 = vunpack.c.h.b16 %v272
    %v601 = vunpack.c.l.b16 %v273
    %v602 = vunpack.c.h.b16 %v273
    %v603 = vunpack.c.l.b16 %v274
    %v604 = vunpack.c.h.b16 %v274
    %v605 = vunpack.c.l.b16 %v275
    %v606 = vunpack.c.h.b16 %v275
    %v607 = vunpack.c.l.b16 %v276
    %v608 = vunpack.c.h.b16 %v276
    %v609 = vunpack.c.l.b16 %v277
    %v610 = vunpack.c.h.b16 %v277
    %v611 = vunpack.c.l.b16 %v278
    %v612 = vunpack.c.h.b16 %v278
    %v613 = vunpack.c.l.b16 %v279
    %v614 = vunpack.c.h.b16 %v279
    %v615 = vunpack.c.l.b16 %v280
    %v616 = vunpack.c.h.b16 %v280
    %v617 = vunpack.c.l.b16 %v281
    %v618 = vunpack.c.h.b16 %v281
    %v619 = vunpack.c.l.b16 %v282
    %v620 = vunpack.c.h.b16 %v282
    %v621 = vunpack.c.l.b16 %v283
    %v622 = vunpack.c.h.b16 %v283
    %v623 = vunpack.c.l.b16 %v284
    %v624 = vunpack.c.h.b16 %v284
    %v625 = vunpack.c.l.b16 %v285
    %v626 = vunpack.c.h.b16 %v285
    %v627 = vunpack.c.l.b16 %v286
    %v628 = vunpack.c.h.b16 %v286
    %v629 = vunpack.c.l.b16 %v287
    %v630 = vunpack.c.h.b16 %v287
    %v631 = vunpack.c.l.b16 %v288
    %v632 = vunpack.c.h.b16 %v288
    %v633 = vunpack.c.l.b16 %v289
    %v634 = vunpack.c.h.b16 %v289
    %v635 = vunpack.c.l.b16 %v290
    %v636 = vunpack.c.h.b16 %v290
    %v637 = vunpack.c.l.b16 %v291
    %v638 = vunpack.c.h.b16 %v291
    %v639 = vunpack.c.l.b16 %v292
    %v640 = vunpack.c.h.b16 %v292
    %v641 = vunpack.c.l.b16 %v293
    %v642 = vunpack.c.h.b16 %v293
    %v643 = vunpack.c.l.b16 %v294
    %v644 = vunpack.c.h.b16 %v294
    %v645 = vunpack.c.l.b16 %v295
    %v646 = vunpack.c.h.b16 %v295
    %v647 = vunpack.c.l.b16 %v296
    %v648 = vunpack.c.h.b16 %v296
    %v649 = vunpack.c.l.b16 %v297
    %v650 = vunpack.c.h.b16 %v297
    %v651 = vunpack.c.l.b16 %v298
    %v652 = vunpack.c.h.b16 %v298
    %v653 = vunpack.c.l.b16 %v299
    %v654 = vunpack.c.h.b16 %v299
    %v655 = vunpack.c.l.b16 %v300
    %v656 = vunpack.c.h.b16 %v300
    %v657 = vunpack.c.l.b16 %v301
    %v658 = vunpack.c.h.b16 %v301
    %v659 = vunpack.c.l.b16 %v302
    %v660 = vunpack.c.h.b16 %v302
    %v661 = vunpack.c.l.b16 %v303
    %v662 = vunpack.c.h.b16 %v303
    %v663 = vunpack.c.l.b16 %v304
    %v664 = vunpack.c.h.b16 %v304
    %v665 = vunpack.c.l.b16 %v305
    %v666 = vunpack.c.h.b16 %v305
    %v667 = vunpack.c.l.b16 %v306
    %v668 = vunpack.c.h.b16 %v306
    %v669 = vunpack.c.l.b16 %v307
    %v670 = vunpack.c.h.b16 %v307
    %v671 = vunpack.c.l.b16 %v308
    %v672 = vunpack.c.h.b16 %v308
    %v673 = vunpack.c.l.b16 %v309
    %v674 = vunpack.c.h.b16 %v309
    %v675 = vunpack.c.l.b16 %v310
    %v676 = vunpack.c.h.b16 %v310
    %v677 = vunpack.c.l.b16 %v311
    %v678 = vunpack.c.h.b16 %v311
    %v679 = vunpack.c.l.b16 %v312
    %v680 = vunpack.c.h.b16 %v312
    %v681 = vunpack.c.l.b16 %v313
    %v682 = vunpack.c.h.b16 %v313
    %v683 = vunpack.c.l.b16 %v314
    %v684 = vunpack.c.h.b16 %v314
    %v685 = vunpack.c.l.b16 %v315
    %v686 = vunpack.c.h.b16 %v315
    %v687 = vunpack.c.l.b16 %v316
    %v688 = vunpack.c.h.b16 %v316
    %v689 = vunpack.c.l.b16 %v317
    %v690 = vunpack.c.h.b16 %v317
    %v691 = vunpack.c.l.b16 %v318
    %v692 = vunpack.c.h.b16 %v318
    %v693 = vunpack.c.l.b16 %v319
    %v694 = vunpack.c.h.b16 %v319
    %v695 = vunpack.c.l.b16 %v320
    %v696 = vunpack.c.h.b16 %v320
    %v697 = vunpack.c.l.b16 %v321
    %v698 = vunpack.c.h.b16 %v321
    %v699 = vunpack.c.l.b16 %v322
    %v700 = vunpack.c.h.b16 %v322
    %v701 = vunpack.c.l.b16 %v323
    %v702 = vunpack.c.h.b16 %v323
    %v703 = vunpack.c.l.b16 %v324
    %v704 = vunpack.c.h.b16 %v324
    %v705 = vunpack.c.l.b16 %v325
    %v706 = vunpack.c.h.b16 %v325
    %v707 = vunpack.c.l.b16 %v326
    %v708 = vunpack.c.h.b16 %v326
    %v709 = vunpack.c.l.b16 %v327
    %v710 = vunpack.c.h.b16 %v327
    %v711 = vunpack.c.l.b16 %v328
    %v712 = vunpack.c.h.b16 %v328
    %v713 = vunpack.c.l.b16 %v329
    %v714 = vunpack.c.h.b16 %v329
    %v715 = vunpack.c.l.b16 %v330
    %v716 = vunpack.c.h.b16 %v330
    %v717 = vunpack.c.l.b16 %v331
    %v718 = vunpack.c.h.b16 %v331
    %v719 = vunpack.c.l.b16 %v332
    %v720 = vunpack.c.h.b16 %v332
    %v721 = vunpack.c.l.b16 %v333
    %v722 = vunpack.c.h.b16 %v333
    %v723 = vunpack.c.l.b16 %v334
    %v724 = vunpack.c.h.b16 %v334
    %v725 = vunpack.c.l.b16 %v335
    %v726 = vunpack.c.h.b16 %v335
    %v727 = vunpack.c.l.b16 %v336
    %v728 = vunpack.c.h.b16 %v336
    %v729 = vunpack.c.l.b16 %v337
    %v730 = vunpack.c.h.b16 %v337
    %v731 = vunpack.c.l.b16 %v338
    %v732 = vunpack.c.h.b16 %v338
    %v733 = vunpack.c.l.b16 %v339
    %v734 = vunpack.c.h.b16 %v339
    %v735 = vunpack.c.l.b16 %v340
    %v736 = vunpack.c.h.b16 %v340
    %v737 = vunpack.c.l.b16 %v341
    %v738 = vunpack.c.h.b16 %v341
    %v739 = vunpack.c.l.b16 %v342
    %v740 = vunpack.c.h.b16 %v342
    %v741 = vunpack.c.l.b16 %v343
    %v742 = vunpack.c.h.b16 %v343
    %v743 = vunpack.c.l.b16 %v344
    %v744 = vunpack.c.h.b16 %v344
    %v745 = vunpack.c.l.b16 %v345
    %v746 = vunpack.c.h.b16 %v345
    %v747 = vunpack.c.l.b16 %v346
    %v748 = vunpack.c.h.b16 %v346
    %v749 = vunpack.c.l.b16 %v347
    %v750 = vunpack.c.h.b16 %v347
    %v751 = vunpack.c.l.b16 %v348
    %v752 = vunpack.c.h.b16 %v348
    %v753 = vunpack.c.l.b16 %v349
    %v754 = vunpack.c.h.b16 %v349
    %v755 = vunpack.c.l.b16 %v350
    %v756 = vunpack.c.h.b16 %v350
    %v757 = vpack.c.b16 %v505, %v501
    %v758 = vpack.c.b16 %v506, %v502
    %v759 = vpack.c.b16 %v507, %v503
    %v760 = vpack.c.b16 %v508, %v504
    %v761 = vpack.c.b16 %v513, %v509
    %v762 = vpack.c.b16 %v514, %v510
    %v763 = vpack.c.b16 %v515, %v511
    %v764 = vpack.c.b16 %v516, %v512
    %v765 = vpack.c.b16 %v521, %v517
    %v766 = vpack.c.b16 %v522, %v518
    %v767 = vpack.c.b16 %v523, %v519
    %v768 = vpack.c.b16 %v524, %v520
    %v769 = vpack.c.b16 %v529, %v525
    %v770 = vpack.c.b16 %v530, %v526
    %v771 = vpack.c.b16 %v531, %v527
    %v772 = vpack.c.b16 %v532, %v528
    %v773 = vpack.c.b16 %v537, %v533
    %v774 = vpack.c.b16 %v538, %v534
    %v775 = vpack.c.b16 %v539, %v535
    %v776 = vpack.c.b16 %v540, %v536
    %v777 = vpack.c.b16 %v545, %v541
    %v778 = vpack.c.b16 %v546, %v542
    %v779 = vpack.c.b16 %v547, %v543
    %v780 = vpack.c.b16 %v548, %v544
    %v781 = vpack.c.b16 %v553, %v549
    %v782 = vpack.c.b16 %v554, %v550
    %v783 = vpack.c.b16 %v555, %v551
    %v784 = vpack.c.b16 %v556, %v552
    %v785 = vpack.c.b16 %v561, %v557
    %v786 = vpack.c.b16 %v562, %v558
    %v787 = vpack.c.b16 %v563, %v559
    %v788 = vpack.c.b16 %v564, %v560
    %v789 = vpack.c.b16 %v569, %v565
    %v790 = vpack.c.b16 %v570, %v566
    %v791 = vpack.c.b16 %v571, %v567
    %v792 = vpack.c.b16 %v572, %v568
    %v793 = vpack.c.b16 %v577, %v573
    %v794 = vpack.c.b16 %v578, %v574
    %v795 = vpack.c.b16 %v579, %v575
    %v796 = vpack.c.b16 %v580, %v576
    %v797 = vpack.c.b16 %v585, %v581
    %v798 = vpack.c.b16 %v586, %v582
    %v799 = vpack.c.b16 %v587, %v583
    %v800 = vpack.c.b16 %v588, %v584
    %v801 = vpack.c.b16 %v593, %v589
    %v802 = vpack.c.b16 %v594, %v590
    %v803 = vpack.c.b16 %v595, %v591
    %v804 = vpack.c.b16 %v596, %v592
    %v805 = vpack.c.b16 %v601, %v597
    %v806 = vpack.c.b16 %v602, %v598
    %v807 = vpack.c.b16 %v603, %v599
    %v808 = vpack.c.b16 %v604, %v600
    %v809 = vpack.c.b16 %v609, %v605
    %v810 = vpack.c.b16 %v610, %v606
    %v811 = vpack.c.b16 %v611, %v607
    %v812 = vpack.c.b16 %v612, %v608
    %v813 = vpack.c.b16 %v617, %v613
    %v814 = vpack.c.b16 %v618, %v614
    %v815 = vpack.c.b16 %v619, %v615
    %v816 = vpack.c.b16 %v620, %v616
    %v817 = vpack.c.b16 %v625, %v621
    %v818 = vpack.c.b16 %v626, %v622
    %v819 = vpack.c.b16 %v627, %v623
    %v820 = vpack.c.b16 %v628, %v624
    %v821 = vpack.c.b16 %v633, %v629
    %v822 = vpack.c.b16 %v634, %v630
    %v823 = vpack.c.b16 %v635, %v631
    %v824 = vpack.c.b16 %v636, %v632
    %v825 = vpack.c.b16 %v641, %v637
    %v826 = vpack.c.b16 %v642, %v638
    %v827 = vpack.c.b16 %v643, %v639
    %v828 = vpack.c.b16 %v644, %v640
    %v829 = vpack.c.b16 %v649, %v645
    %v830 = vpack.c.b16 %v650, %v646
    %v831 = vpack.c.b16 %v651, %v647
    %v832 = vpack.c.b16 %v652, %v648
    %v833 = vpack.c.b16 %v657, %v653
    %v834 = vpack.c.b16 %v658, %v654
    %v835 = vpack.c.b16 %v659, %v655
    %v836 = vpack.c.b16 %v660, %v656
    %v837 = vpack.c.b16 %v665, %v661
    %v838 = vpack.c.b16 %v666, %v662
    %v839 = vpack.c.b16 %v667, %v663
    %v840 = vpack.c.b16 %v668, %v664
    %v841 = vpack.c.b16 %v673, %v669
    %v842 = vpack.c.b16 %v674, %v670
    %v843 = vpack.c.b16 %v675, %v671
    %v844 = vpack.c.b16 %v676, %v672
    %v845 = vpack.c.b16 %v681, %v677
    %v846 = vpack.c.b16 %v682, %v678
    %v847 = vpack.c.b16 %v683, %v679
    %v848 = vpack.c.b16 %v684, %v680
    %v849 = vpack.c.b16 %v689, %v685
    %v850 = vpack.c.b16 %v690, %v686
    %v851 = vpack.c.b16 %v691, %v687
    %v852 = vpack.c.b16 %v692, %v688
    %v853 = vpack.c.b16 %v697, %v693
    %v854 = vpack.c.b16 %v698, %v694
    %v855 = vpack.c.b16 %v699, %v695
    %v856 = vpack.c.b16 %v700, %v696
    %v857 = vpack.c.b16 %v705, %v701
    %v858 = vpack.c.b16 %v706, %v702
    %v859 = vpack.c.b16 %v707, %v703
    %v860 = vpack.c.b16 %v708, %v704
    %v861 = vpack.c.b16 %v713, %v709
    %v862 = vpack.c.b16 %v714, %v710
    %v863 = vpack.c.b16 %v715, %v711
    %v864 = vpack.c.b16 %v716, %v712
    %v865 = vpack.c.b16 %v721, %v717
    %v866 = vpack.c.b16 %v722, %v718
    %v867 = vpack.c.b16 %v723, %v719
    %v868 = vpack.c.b16 %v724, %v720
    %v869 = vpack.c.b16 %v729, %v725
    %v870 = vpack.c.b16 %v730, %v726
    %v871 = vpack.c.b16 %v731, %v727
    %v872 = vpack.c.b16 %v732, %v728
    %v873 = vpack.c.b16 %v737, %v733
    %v874 = vpack.c.b16 %v738, %v734
    %v875 = vpack.c.b16 %v739, %v735
    %v876 = vpack.c.b16 %v740, %v736
    %v877 = vpack.c.b16 %v745, %v741
    %v878 = vpack.c.b16 %v746, %v742
    %v879 = vpack.c.b16 %v747, %v743
    %v880 = vpack.c.b16 %v748, %v744
    %v881 = vpack.c.b16 %v753, %v749
    %v882 = vpack.c.b16 %v754, %v750
    %v883 = vpack.c.b16 %v755, %v751
    %v884 = vpack.c.b16 %v756, %v752
    %1013 = vmatprep.subr.bf16.mxu0 %v758
    %1014 = vmatpush1.bf16.msra.mxu0 %v757
    %1015 = vmatprep.subr.bf16.mxu0 %v762
    %1016 = vmatpush1.bf16.msra.mxu0 %v761
    %1017 = vmatprep.subr.bf16.mxu0 %v766
    %1018 = vmatpush1.bf16.msra.mxu0 %v765
    %1019 = vmatprep.subr.bf16.mxu0 %v770
    %1020 = vmatpush1.bf16.msra.mxu0 %v769
    %1021 = vmatprep.subr.bf16.mxu0 %v774
    %1022 = vmatpush1.bf16.msra.mxu0 %v773
    %1023 = vmatprep.subr.bf16.mxu0 %v778
    %1024 = vmatpush1.bf16.msra.mxu0 %v777
    %1025 = vmatprep.subr.bf16.mxu0 %v782
    %1026 = vmatpush1.bf16.msra.mxu0 %v781
    %1027 = vmatprep.subr.bf16.mxu0 %v786
    %1028 = vmatpush1.bf16.msra.mxu0 %v785
    %1029 = vmatprep.subr.bf16.mxu0 %v790
    %1030 = vmatpush1.bf16.msra.mxu0 %v789
    %1031 = vmatprep.subr.bf16.mxu0 %v794
    %1032 = vmatpush1.bf16.msra.mxu0 %v793
    %1033 = vmatprep.subr.bf16.mxu0 %v798
    %1034 = vmatpush1.bf16.msra.mxu0 %v797
    %1035 = vmatprep.subr.bf16.mxu0 %v802
    %1036 = vmatpush1.bf16.msra.mxu0 %v801
    %1037 = vmatprep.subr.bf16.mxu0 %v806
    %1038 = vmatpush1.bf16.msra.mxu0 %v805
    %1039 = vmatprep.subr.bf16.mxu0 %v810
    %1040 = vmatpush1.bf16.msra.mxu0 %v809
    %1041 = vmatprep.subr.bf16.mxu0 %v814
    %1042 = vmatpush1.bf16.msra.mxu0 %v813
    %1043 = vmatprep.subr.bf16.mxu0 %v818
    %1044 = vmatpush1.bf16.msra.mxu0 %v817
    %1045 = vmatprep.mubr.bf16.mxu0 %v220
    %1046 = vmatmul.mubr.bf16.gmra.mrb[0].mxu0 %v219
    %v1047 = vpop.f32.mrb[0].mxu0
    %v1048 = vadd.f32 %v356, %v1047
    %v1049 = vpop.f32.mrb[0].mxu0
    %v1050 = vadd.f32 %v360, %v1049
    %v1051 = vpop.f32.mrb[0].mxu0
    %v1052 = vadd.f32 %v356, %v1051
    %v1053 = vpop.f32.mrb[0].mxu0
    %v1054 = vadd.f32 %v360, %v1053
    %1055 = vdwg.mxu0
    %1056 = vmatprep.subr.bf16.mxu0 %v822
    %1057 = vmatpush1.bf16.msra.mxu0 %v821
    %1058 = vmatprep.subr.bf16.mxu0 %v826
    %1059 = vmatpush1.bf16.msra.mxu0 %v825
    %1060 = vmatprep.subr.bf16.mxu0 %v830
    %1061 = vmatpush1.bf16.msra.mxu0 %v829
    %1062 = vmatprep.subr.bf16.mxu0 %v834
    %1063 = vmatpush1.bf16.msra.mxu0 %v833
    %1064 = vmatprep.subr.bf16.mxu0 %v838
    %1065 = vmatpush1.bf16.msra.mxu0 %v837
    %1066 = vmatprep.subr.bf16.mxu0 %v842
    %1067 = vmatpush1.bf16.msra.mxu0 %v841
    %1068 = vmatprep.subr.bf16.mxu0 %v846
    %1069 = vmatpush1.bf16.msra.mxu0 %v845
    %1070 = vmatprep.subr.bf16.mxu0 %v850
    %1071 = vmatpush1.bf16.msra.mxu0 %v849
    %1072 = vmatprep.subr.bf16.mxu0 %v854
    %1073 = vmatpush1.bf16.msra.mxu0 %v853
    %1074 = vmatprep.subr.bf16.mxu0 %v858
    %1075 = vmatpush1.bf16.msra.mxu0 %v857
    %1076 = vmatprep.subr.bf16.mxu0 %v862
    %1077 = vmatpush1.bf16.msra.mxu0 %v861
    %1078 = vmatprep.subr.bf16.mxu0 %v866
    %1079 = vmatpush1.bf16.msra.mxu0 %v865
    %1080 = vmatprep.subr.bf16.mxu0 %v870
    %1081 = vmatpush1.bf16.msra.mxu0 %v869
    %1082 = vmatprep.subr.bf16.mxu0 %v874
    %1083 = vmatpush1.bf16.msra.mxu0 %v873
    %1084 = vmatprep.subr.bf16.mxu0 %v878
    %1085 = vmatpush1.bf16.msra.mxu0 %v877
    %1086 = vmatprep.subr.bf16.mxu0 %v882
    %1087 = vmatpush1.bf16.msra.mxu0 %v881
    %1088 = vmatprep.mubr.bf16.mxu0 %v222
    %1089 = vmatmul.mubr.bf16.gmra.mrb[0].mxu0 %v221
    %v1090 = vpop.f32.mrb[0].mxu0
    %v1091 = vadd.f32 %v1048, %v1090
    %v1092 = vpop.f32.mrb[0].mxu0
    %v1093 = vadd.f32 %v1050, %v1092
    %v1094 = vpop.f32.mrb[0].mxu0
    %v1095 = vadd.f32 %v1052, %v1094
    %v1096 = vpop.f32.mrb[0].mxu0
    %v1097 = vadd.f32 %v1054, %v1096
    %1098 = vdwg.mxu0
    %1099 = vmatprep.subr.bf16.mxu0 %v760
    %1100 = vmatpush1.bf16.msra.mxu0 %v759
    %1101 = vmatprep.subr.bf16.mxu0 %v764
    %1102 = vmatpush1.bf16.msra.mxu0 %v763
    %1103 = vmatprep.subr.bf16.mxu0 %v768
    %1104 = vmatpush1.bf16.msra.mxu0 %v767
    %1105 = vmatprep.subr.bf16.mxu0 %v772
    %1106 = vmatpush1.bf16.msra.mxu0 %v771
    %1107 = vmatprep.subr.bf16.mxu0 %v776
    %1108 = vmatpush1.bf16.msra.mxu0 %v775
    %1109 = vmatprep.subr.bf16.mxu0 %v780
    %1110 = vmatpush1.bf16.msra.mxu0 %v779
    %1111 = vmatprep.subr.bf16.mxu0 %v784
    %1112 = vmatpush1.bf16.msra.mxu0 %v783
    %1113 = vmatprep.subr.bf16.mxu0 %v788
    %1114 = vmatpush1.bf16.msra.mxu0 %v787
    %1115 = vmatprep.subr.bf16.mxu0 %v792
    %1116 = vmatpush1.bf16.msra.mxu0 %v791
    %1117 = vmatprep.subr.bf16.mxu0 %v796
    %1118 = vmatpush1.bf16.msra.mxu0 %v795
    %1119 = vmatprep.subr.bf16.mxu0 %v800
    %1120 = vmatpush1.bf16.msra.mxu0 %v799
    %1121 = vmatprep.subr.bf16.mxu0 %v804
    %1122 = vmatpush1.bf16.msra.mxu0 %v803
    %1123 = vmatprep.subr.bf16.mxu0 %v808
    %1124 = vmatpush1.bf16.msra.mxu0 %v807
    %1125 = vmatprep.subr.bf16.mxu0 %v812
    %1126 = vmatpush1.bf16.msra.mxu0 %v811
    %1127 = vmatprep.subr.bf16.mxu0 %v816
    %1128 = vmatpush1.bf16.msra.mxu0 %v815
    %1129 = vmatprep.subr.bf16.mxu0 %v820
    %1130 = vmatpush1.bf16.msra.mxu0 %v819
    %1131 = vmatprep.mubr.bf16.mxu0 %v220
    %1132 = vmatmul.mubr.bf16.gmra.mrb[0].mxu0 %v219
    %v1133 = vpop.f32.mrb[0].mxu0
    %v1134 = vadd.f32 %v364, %v1133
    %v1135 = vpop.f32.mrb[0].mxu0
    %v1136 = vadd.f32 %v368, %v1135
    %v1137 = vpop.f32.mrb[0].mxu0
    %v1138 = vadd.f32 %v364, %v1137
    %v1139 = vpop.f32.mrb[0].mxu0
    %v1140 = vadd.f32 %v368, %v1139
    %1141 = vdwg.mxu0
    %1142 = vmatprep.subr.bf16.mxu0 %v824
    %1143 = vmatpush1.bf16.msra.mxu0 %v823
    %1144 = vmatprep.subr.bf16.mxu0 %v828
    %1145 = vmatpush1.bf16.msra.mxu0 %v827
    %1146 = vmatprep.subr.bf16.mxu0 %v832
    %1147 = vmatpush1.bf16.msra.mxu0 %v831
    %1148 = vmatprep.subr.bf16.mxu0 %v836
    %1149 = vmatpush1.bf16.msra.mxu0 %v835
    %1150 = vmatprep.subr.bf16.mxu0 %v840
    %1151 = vmatpush1.bf16.msra.mxu0 %v839
    %1152 = vmatprep.subr.bf16.mxu0 %v844
    %1153 = vmatpush1.bf16.msra.mxu0 %v843
    %1154 = vmatprep.subr.bf16.mxu0 %v848
    %1155 = vmatpush1.bf16.msra.mxu0 %v847
    %1156 = vmatprep.subr.bf16.mxu0 %v852
    %1157 = vmatpush1.bf16.msra.mxu0 %v851
    %1158 = vmatprep.subr.bf16.mxu0 %v856
    %1159 = vmatpush1.bf16.msra.mxu0 %v855
    %1160 = vmatprep.subr.bf16.mxu0 %v860
    %1161 = vmatpush1.bf16.msra.mxu0 %v859
    %1162 = vmatprep.subr.bf16.mxu0 %v864
    %1163 = vmatpush1.bf16.msra.mxu0 %v863
    %1164 = vmatprep.subr.bf16.mxu0 %v868
    %1165 = vmatpush1.bf16.msra.mxu0 %v867
    %1166 = vmatprep.subr.bf16.mxu0 %v872
    %1167 = vmatpush1.bf16.msra.mxu0 %v871
    %1168 = vmatprep.subr.bf16.mxu0 %v876
    %1169 = vmatpush1.bf16.msra.mxu0 %v875
    %1170 = vmatprep.subr.bf16.mxu0 %v880
    %1171 = vmatpush1.bf16.msra.mxu0 %v879
    %1172 = vmatprep.subr.bf16.mxu0 %v884
    %1173 = vmatpush1.bf16.msra.mxu0 %v883
    %1174 = vmatprep.mubr.bf16.mxu0 %v222
    %1175 = vmatmul.mubr.bf16.gmra.mrb[0].mxu0 %v221
    %v1176 = vpop.f32.mrb[0].mxu0
    %v1177 = vadd.f32 %v1134, %v1176
    %v1178 = vpop.f32.mrb[0].mxu0
    %v1179 = vadd.f32 %v1136, %v1178
    %v1180 = vpop.f32.mrb[0].mxu0
    %v1181 = vadd.f32 %v1138, %v1180
    %v1182 = vpop.f32.mrb[0].mxu0
    %v1183 = vadd.f32 %v1140, %v1182
    %1184 = vdwg.mxu0
    %v1185 = vmax.f32 %v1091, 0.0
    %v1186 = vmax.f32 %v1093, 0.0
    %v1187 = vmax.f32 %v1177, 0.0
    %v1188 = vmax.f32 %v1179, 0.0
    %v1189 = vmax.f32 %v1095, 0.0
    %v1190 = vmax.f32 %v1097, 0.0
    %v1191 = vmax.f32 %v1181, 0.0
    %v1192 = vmax.f32 %v1183, 0.0
    %v1193 = vpack.c.bf16 %v1189, %v1185
    %v1194 = vpack.c.bf16 %v1190, %v1186
    %v1195 = vpack.c.bf16 %v1191, %v1187
    %v1196 = vpack.c.bf16 %v1192, %v1188
    %v1197 = vld [vmem:[#allocation6] sm:$0xf]
    %v1198 = vld [vmem:[#allocation6 + $0x4] sm:$0xf]
    %v1199 = vld [vmem:[#allocation6 + $0x8] sm:$0xf]
    %v1200 = vld [vmem:[#allocation6 + $0xc] sm:$0xf]
    %v1201 = vld [vmem:[#allocation6 + $0x10] sm:$0xf]
    %v1202 = vld [vmem:[#allocation6 + $0x14] sm:$0xf]
    %v1203 = vld [vmem:[#allocation6 + $0x18] sm:$0xf]
    %v1204 = vld [vmem:[#allocation6 + $0x1c] sm:$0xf]
    %v1205 = vld [vmem:[#allocation6 + $0x20] sm:$0xf]
    %v1206 = vld [vmem:[#allocation6 + $0x24] sm:$0xf]
    %v1207 = vld [vmem:[#allocation6 + $0x28] sm:$0xf]
    %v1208 = vld [vmem:[#allocation6 + $0x2c] sm:$0xf]
    %v1209 = vld [vmem:[#allocation6 + $0x30] sm:$0xf]
    %v1210 = vld [vmem:[#allocation6 + $0x34] sm:$0xf]
    %v1211 = vld [vmem:[#allocation6 + $0x38] sm:$0xf]
    %v1212 = vld [vmem:[#allocation6 + $0x3c] sm:$0xf]
    %v1213 = vld [vmem:[#allocation6 + $0x40] sm:$0xf]
    %v1214 = vld [vmem:[#allocation6 + $0x44] sm:$0xf]
    %v1215 = vld [vmem:[#allocation6 + $0x48] sm:$0xf]
    %v1216 = vld [vmem:[#allocation6 + $0x4c] sm:$0xf]
    %v1217 = vld [vmem:[#allocation6 + $0x50] sm:$0xf]
    %v1218 = vld [vmem:[#allocation6 + $0x54] sm:$0xf]
    %v1219 = vld [vmem:[#allocation6 + $0x58] sm:$0xf]
    %v1220 = vld [vmem:[#allocation6 + $0x5c] sm:$0xf]
    %v1221 = vld [vmem:[#allocation6 + $0x60] sm:$0xf]
    %v1222 = vld [vmem:[#allocation6 + $0x64] sm:$0xf]
    %v1223 = vld [vmem:[#allocation6 + $0x68] sm:$0xf]
    %v1224 = vld [vmem:[#allocation6 + $0x6c] sm:$0xf]
    %v1225 = vld [vmem:[#allocation6 + $0x70] sm:$0xf]
    %v1226 = vld [vmem:[#allocation6 + $0x74] sm:$0xf]
    %v1227 = vld [vmem:[#allocation6 + $0x78] sm:$0xf]
    %v1228 = vld [vmem:[#allocation6 + $0x7c] sm:$0xf]
    %v1229 = vld [vmem:[#allocation6 + $0x80] sm:$0xf]
    %v1230 = vld [vmem:[#allocation6 + $0x84] sm:$0xf]
    %v1231 = vld [vmem:[#allocation6 + $0x88] sm:$0xf]
    %v1232 = vld [vmem:[#allocation6 + $0x8c] sm:$0xf]
    %v1233 = vld [vmem:[#allocation6 + $0x90] sm:$0xf]
    %v1234 = vld [vmem:[#allocation6 + $0x94] sm:$0xf]
    %v1235 = vld [vmem:[#allocation6 + $0x98] sm:$0xf]
    %v1236 = vld [vmem:[#allocation6 + $0x9c] sm:$0xf]
    %v1237 = vld [vmem:[#allocation6 + $0xa0] sm:$0xf]
    %v1238 = vld [vmem:[#allocation6 + $0xa4] sm:$0xf]
    %v1239 = vld [vmem:[#allocation6 + $0xa8] sm:$0xf]
    %v1240 = vld [vmem:[#allocation6 + $0xac] sm:$0xf]
    %v1241 = vld [vmem:[#allocation6 + $0xb0] sm:$0xf]
    %v1242 = vld [vmem:[#allocation6 + $0xb4] sm:$0xf]
    %v1243 = vld [vmem:[#allocation6 + $0xb8] sm:$0xf]
    %v1244 = vld [vmem:[#allocation6 + $0xbc] sm:$0xf]
    %v1245 = vld [vmem:[#allocation6 + $0xc0] sm:$0xf]
    %v1246 = vld [vmem:[#allocation6 + $0xc4] sm:$0xf]
    %v1247 = vld [vmem:[#allocation6 + $0xc8] sm:$0xf]
    %v1248 = vld [vmem:[#allocation6 + $0xcc] sm:$0xf]
    %v1249 = vld [vmem:[#allocation6 + $0xd0] sm:$0xf]
    %v1250 = vld [vmem:[#allocation6 + $0xd4] sm:$0xf]
    %v1251 = vld [vmem:[#allocation6 + $0xd8] sm:$0xf]
    %v1252 = vld [vmem:[#allocation6 + $0xdc] sm:$0xf]
    %v1253 = vld [vmem:[#allocation6 + $0xe0] sm:$0xf]
    %v1254 = vld [vmem:[#allocation6 + $0xe4] sm:$0xf]
    %v1255 = vld [vmem:[#allocation6 + $0xe8] sm:$0xf]
    %v1256 = vld [vmem:[#allocation6 + $0xec] sm:$0xf]
    %v1257 = vld [vmem:[#allocation6 + $0xf0] sm:$0xf]
    %v1258 = vld [vmem:[#allocation6 + $0xf4] sm:$0xf]
    %v1259 = vld [vmem:[#allocation6 + $0xf8] sm:$0xf]
    %v1260 = vld [vmem:[#allocation6 + $0xfc] sm:$0xf]
    %v1261 = vld [vmem:[%s6] sm:$0x1]
    %v1263 = vlaneseq
    %v1264 = vshrl.u32 %v1263, 7
    %v1265 = vsub.s32 0, %v1264
    %v1266 = vrot.slane %v1261, %v1265
    %v1332 = vunpack.c.l.b16 %v1197
    %v1333 = vunpack.c.l.b16 %v1198
    %v1334 = vunpack.c.l.b16 %v1199
    %v1335 = vunpack.c.l.b16 %v1200
    %v1336 = vunpack.c.l.b16 %v1201
    %v1337 = vunpack.c.l.b16 %v1202
    %v1338 = vunpack.c.l.b16 %v1203
    %v1339 = vunpack.c.l.b16 %v1204
    %v1340 = vunpack.c.l.b16 %v1205
    %v1341 = vunpack.c.l.b16 %v1206
    %v1342 = vunpack.c.l.b16 %v1207
    %v1343 = vunpack.c.l.b16 %v1208
    %v1344 = vunpack.c.l.b16 %v1209
    %v1345 = vunpack.c.l.b16 %v1210
    %v1346 = vunpack.c.l.b16 %v1211
    %v1347 = vunpack.c.l.b16 %v1212
    %v1348 = vunpack.c.l.b16 %v1213
    %v1349 = vunpack.c.l.b16 %v1214
    %v1350 = vunpack.c.l.b16 %v1215
    %v1351 = vunpack.c.l.b16 %v1216
    %v1352 = vunpack.c.l.b16 %v1217
    %v1353 = vunpack.c.l.b16 %v1218
    %v1354 = vunpack.c.l.b16 %v1219
    %v1355 = vunpack.c.l.b16 %v1220
    %v1356 = vunpack.c.l.b16 %v1221
    %v1357 = vunpack.c.l.b16 %v1222
    %v1358 = vunpack.c.l.b16 %v1223
    %v1359 = vunpack.c.l.b16 %v1224
    %v1360 = vunpack.c.l.b16 %v1225
    %v1361 = vunpack.c.l.b16 %v1226
    %v1362 = vunpack.c.l.b16 %v1227
    %v1363 = vunpack.c.l.b16 %v1228
    %v1364 = vunpack.c.l.b16 %v1229
    %v1365 = vunpack.c.l.b16 %v1230
    %v1366 = vunpack.c.l.b16 %v1231
    %v1367 = vunpack.c.l.b16 %v1232
    %v1368 = vunpack.c.l.b16 %v1233
    %v1369 = vunpack.c.l.b16 %v1234
    %v1370 = vunpack.c.l.b16 %v1235
    %v1371 = vunpack.c.l.b16 %v1236
    %v1372 = vunpack.c.l.b16 %v1237
    %v1373 = vunpack.c.l.b16 %v1238
    %v1374 = vunpack.c.l.b16 %v1239
    %v1375 = vunpack.c.l.b16 %v1240
    %v1376 = vunpack.c.l.b16 %v1241
    %v1377 = vunpack.c.l.b16 %v1242
    %v1378 = vunpack.c.l.b16 %v1243
    %v1379 = vunpack.c.l.b16 %v1244
    %v1380 = vunpack.c.l.b16 %v1245
    %v1381 = vunpack.c.l.b16 %v1246
    %v1382 = vunpack.c.l.b16 %v1247
    %v1383 = vunpack.c.l.b16 %v1248
    %v1384 = vunpack.c.l.b16 %v1249
    %v1385 = vunpack.c.l.b16 %v1250
    %v1386 = vunpack.c.l.b16 %v1251
    %v1387 = vunpack.c.l.b16 %v1252
    %v1388 = vunpack.c.l.b16 %v1253
    %v1389 = vunpack.c.l.b16 %v1254
    %v1390 = vunpack.c.l.b16 %v1255
    %v1391 = vunpack.c.l.b16 %v1256
    %v1392 = vunpack.c.l.b16 %v1257
    %v1393 = vunpack.c.l.b16 %v1258
    %v1394 = vunpack.c.l.b16 %v1259
    %v1395 = vunpack.c.l.b16 %v1260
    %v1396 = vpack.c.b16 %v1333, %v1332
    %v1397 = vpack.c.b16 %v1335, %v1334
    %v1398 = vpack.c.b16 %v1337, %v1336
    %v1399 = vpack.c.b16 %v1339, %v1338
    %v1400 = vpack.c.b16 %v1341, %v1340
    %v1401 = vpack.c.b16 %v1343, %v1342
    %v1402 = vpack.c.b16 %v1345, %v1344
    %v1403 = vpack.c.b16 %v1347, %v1346
    %v1404 = vpack.c.b16 %v1349, %v1348
    %v1405 = vpack.c.b16 %v1351, %v1350
    %v1406 = vpack.c.b16 %v1353, %v1352
    %v1407 = vpack.c.b16 %v1355, %v1354
    %v1408 = vpack.c.b16 %v1357, %v1356
    %v1409 = vpack.c.b16 %v1359, %v1358
    %v1410 = vpack.c.b16 %v1361, %v1360
    %v1411 = vpack.c.b16 %v1363, %v1362
    %v1412 = vpack.c.b16 %v1365, %v1364
    %v1413 = vpack.c.b16 %v1367, %v1366
    %v1414 = vpack.c.b16 %v1369, %v1368
    %v1415 = vpack.c.b16 %v1371, %v1370
    %v1416 = vpack.c.b16 %v1373, %v1372
    %v1417 = vpack.c.b16 %v1375, %v1374
    %v1418 = vpack.c.b16 %v1377, %v1376
    %v1419 = vpack.c.b16 %v1379, %v1378
    %v1420 = vpack.c.b16 %v1381, %v1380
    %v1421 = vpack.c.b16 %v1383, %v1382
    %v1422 = vpack.c.b16 %v1385, %v1384
    %v1423 = vpack.c.b16 %v1387, %v1386
    %v1424 = vpack.c.b16 %v1389, %v1388
    %v1425 = vpack.c.b16 %v1391, %v1390
    %v1426 = vpack.c.b16 %v1393, %v1392
    %v1427 = vpack.c.b16 %v1395, %v1394
    %1460 = vmatprep.subr.bf16.mxu0 0
    %1461 = vmatpush1.bf16.msra.mxu0 %v1396
    %1462 = vmatprep.subr.bf16.mxu0 0
    %1463 = vmatpush1.bf16.msra.mxu0 %v1397
    %1464 = vmatprep.subr.bf16.mxu0 0
    %1465 = vmatpush1.bf16.msra.mxu0 %v1398
    %1466 = vmatprep.subr.bf16.mxu0 0
    %1467 = vmatpush1.bf16.msra.mxu0 %v1399
    %1468 = vmatprep.subr.bf16.mxu0 0
    %1469 = vmatpush1.bf16.msra.mxu0 %v1400
    %1470 = vmatprep.subr.bf16.mxu0 0
    %1471 = vmatpush1.bf16.msra.mxu0 %v1401
    %1472 = vmatprep.subr.bf16.mxu0 0
    %1473 = vmatpush1.bf16.msra.mxu0 %v1402
    %1474 = vmatprep.subr.bf16.mxu0 0
    %1475 = vmatpush1.bf16.msra.mxu0 %v1403
    %1476 = vmatprep.subr.bf16.mxu0 0
    %1477 = vmatpush1.bf16.msra.mxu0 %v1404
    %1478 = vmatprep.subr.bf16.mxu0 0
    %1479 = vmatpush1.bf16.msra.mxu0 %v1405
    %1480 = vmatprep.subr.bf16.mxu0 0
    %1481 = vmatpush1.bf16.msra.mxu0 %v1406
    %1482 = vmatprep.subr.bf16.mxu0 0
    %1483 = vmatpush1.bf16.msra.mxu0 %v1407
    %1484 = vmatprep.subr.bf16.mxu0 0
    %1485 = vmatpush1.bf16.msra.mxu0 %v1408
    %1486 = vmatprep.subr.bf16.mxu0 0
    %1487 = vmatpush1.bf16.msra.mxu0 %v1409
    %1488 = vmatprep.subr.bf16.mxu0 0
    %1489 = vmatpush1.bf16.msra.mxu0 %v1410
    %1490 = vmatprep.subr.bf16.mxu0 0
    %1491 = vmatpush1.bf16.msra.mxu0 %v1411
    %1492 = vmatprep.mubr.bf16.mxu0 %v1194
    %1493 = vmatmul.mubr.bf16.gmra.mrb[0].mxu0 %v1193
    %v1494 = vpop.f32.mrb[0].mxu0
    %v1495 = vadd.f32 %v1266, %v1494
    %v1496 = vpop.f32.mrb[0].mxu0
    %v1497 = vpop.f32.mrb[0].mxu0
    %v1498 = vadd.f32 %v1266, %v1497
    %v1499 = vpop.f32.mrb[0].mxu0
    %1500 = vdwg.mxu0
    %1501 = vmatprep.subr.bf16.mxu0 0
    %1502 = vmatpush1.bf16.msra.mxu0 %v1412
    %1503 = vmatprep.subr.bf16.mxu0 0
    %1504 = vmatpush1.bf16.msra.mxu0 %v1413
    %1505 = vmatprep.subr.bf16.mxu0 0
    %1506 = vmatpush1.bf16.msra.mxu0 %v1414
    %1507 = vmatprep.subr.bf16.mxu0 0
    %1508 = vmatpush1.bf16.msra.mxu0 %v1415
    %1509 = vmatprep.subr.bf16.mxu0 0
    %1510 = vmatpush1.bf16.msra.mxu0 %v1416
    %1511 = vmatprep.subr.bf16.mxu0 0
    %1512 = vmatpush1.bf16.msra.mxu0 %v1417
    %1513 = vmatprep.subr.bf16.mxu0 0
    %1514 = vmatpush1.bf16.msra.mxu0 %v1418
    %1515 = vmatprep.subr.bf16.mxu0 0
    %1516 = vmatpush1.bf16.msra.mxu0 %v1419
    %1517 = vmatprep.subr.bf16.mxu0 0
    %1518 = vmatpush1.bf16.msra.mxu0 %v1420
    %1519 = vmatprep.subr.bf16.mxu0 0
    %1520 = vmatpush1.bf16.msra.mxu0 %v1421
    %1521 = vmatprep.subr.bf16.mxu0 0
    %1522 = vmatpush1.bf16.msra.mxu0 %v1422
    %1523 = vmatprep.subr.bf16.mxu0 0
    %1524 = vmatpush1.bf16.msra.mxu0 %v1423
    %1525 = vmatprep.subr.bf16.mxu0 0
    %1526 = vmatpush1.bf16.msra.mxu0 %v1424
    %1527 = vmatprep.subr.bf16.mxu0 0
    %1528 = vmatpush1.bf16.msra.mxu0 %v1425
    %1529 = vmatprep.subr.bf16.mxu0 0
    %1530 = vmatpush1.bf16.msra.mxu0 %v1426
    %1531 = vmatprep.subr.bf16.mxu0 0
    %1532 = vmatpush1.bf16.msra.mxu0 %v1427
    %1533 = vmatprep.mubr.bf16.mxu0 %v1196
    %1534 = vmatmul.mubr.bf16.gmra.mrb[0].mxu0 %v1195
    %v1535 = vpop.f32.mrb[0].mxu0
    %v1536 = vadd.f32 %v1495, %v1535
    %v1537 = vpop.f32.mrb[0].mxu0
    %v1538 = vpop.f32.mrb[0].mxu0
    %v1539 = vadd.f32 %v1498, %v1538
    %v1540 = vpop.f32.mrb[0].mxu0
    %1541 = vdwg.mxu0
    %1542 = vst [vmem:[%s7] sm:$0xff] %v1536
    %1543 = vst [vmem:[%s7 + $0x8] sm:$0xff] %v1539
    // Predicated region
    $region42: #{dqn_forward.1} parent=1 // pred_check
      _
    $region43: #{dqn_forward.1} parent=1 // pred_check_branch
      %1545 = sbr.rel (0) target = $region45
    $region44: #{dqn_forward.1} parent=1 // pred_region
      _
    $region45: #{dqn_forward.1} parent=1 // pred_fallthru
      _
    // Predicated region
    $region46: #{dqn_forward.1} parent=1 // pred_check
      _
    $region47: #{dqn_forward.1} parent=1 // pred_check_branch
      %1547 = sbr.rel (0) target = $region49
    $region48: #{dqn_forward.1} parent=1 // pred_region
      _
    $region49: #{dqn_forward.1} parent=1 // pred_fallthru
      _
    %1548 = vsyncpa [#allocation3], 1
    %1549 = vsyncpa [#allocation5], 1

</llo_original>
